<compile_context>
chip_gen: v7x
topology: tpu7x:2x2x1
jax: 0.10.0
libtpu: 0.0.40
codegen_flags: <defaults>
</compile_context>

<pallas_src>
import functools

import jax
import jax.numpy as jnp
from jax.experimental import pallas as pl
from jax.experimental.pallas import tpu as pltpu


def _round_up(x, m):
    return ((x + m - 1) // m) * m


def _cdiv(a, b):
    return -(-a // b)


def _cvae_kernel(
    # batched inputs
    s_ref, c_ref, eps_ref,
    # encoder params (Q): split fc1 weight (s-part / c-part), packed [mean|logvar] head
    qw1s_ref, qw1c_ref, qb1_ref, qw2_ref, qb2_ref,
    # prior params (P): packed [mean|logvar] head
    pw1_ref, pb1_ref, pw2_ref, pb2_ref,
    # decoder params: split fc3 weight (z-part / c-part), fc4
    w3z_ref, w3c_ref, b3_ref, w4_ref, b4_ref,
    # output slab
    out_ref,
    *, latent_size,
):
    f32 = jnp.float32
    bf16 = jnp.bfloat16

    s = s_ref[...].astype(bf16)
    c = c_ref[...].astype(bf16)
    eps = eps_ref[...]

    # ---- encode: h = relu(s@W1s + c@W1c + b1); [mean|logvar] = h @ [W21|W22] + b ----
    h_enc = (jnp.dot(s, qw1s_ref[...], preferred_element_type=f32)
             + jnp.dot(c, qw1c_ref[...], preferred_element_type=f32)
             + qb1_ref[...])
    h_enc = jnp.maximum(h_enc, 0.0)
    q_ml = jnp.dot(h_enc.astype(bf16), qw2_ref[...],
                   preferred_element_type=f32) + qb2_ref[...]
    q_mean = q_ml[:, :latent_size]
    q_logvar = q_ml[:, latent_size:]

    # ---- prior: h = relu(c @ P_W1 + b1); [mean|logvar] = h @ [P_W21|P_W22] + b ----
    h_p = jnp.dot(c, pw1_ref[...], preferred_element_type=f32) + pb1_ref[...]
    h_p = jnp.maximum(h_p, 0.0)
    p_ml = jnp.dot(h_p.astype(bf16), pw2_ref[...],
                   preferred_element_type=f32) + pb2_ref[...]

    # ---- reparametrize (f32): z = exp(0.5*logvar) * eps + mean ----
    z = jnp.exp(0.5 * q_logvar) * eps + q_mean

    # ---- decode: h = relu(z@W3z + c@W3c + b3); s_rec = h @ W4 + b4 ----
    h_dec = (jnp.dot(z.astype(bf16), w3z_ref[...], preferred_element_type=f32)
             + jnp.dot(c, w3c_ref[...], preferred_element_type=f32)
             + b3_ref[...])
    h_dec = jnp.maximum(h_dec, 0.0)
    s_rec = jnp.dot(h_dec.astype(bf16), w4_ref[...],
                    preferred_element_type=f32) + b4_ref[...]

    # ---- pack everything in-register; single unmasked lane-dense store ----
    parts = [s_rec, q_mean, q_logvar, h_enc,
             p_ml[:, :latent_size], p_ml[:, latent_size:], h_dec]
    total = sum(p.shape[1] for p in parts)
    pad = out_ref.shape[1] - total
    if pad:
        parts.append(jnp.zeros((s_rec.shape[0], pad), f32))
    out_ref[...] = jnp.concatenate(parts, axis=1)


def init_cvae_params(key, input_size, conditioning_size, latent_size,
                     encoder_hidden_size, prior_hidden_size, decoder_hidden_size):
    """nn.Linear-style init (uniform +/- 1/sqrt(fan_in)); weights stored as
    [in_features, out_features]; matmul weights in bf16, biases in f32.
    Concat-matmul weights (Q_fc1, fc3) are split; mean/logvar heads are packed."""
    def linear(k, fan_in, fan_out):
        kw, kb = jax.random.split(k)
        bound = 1.0 / jnp.sqrt(fan_in)
        w = jax.random.uniform(kw, (fan_in, fan_out), jnp.float32, -bound, bound)
        b = jax.random.uniform(kb, (1, fan_out), jnp.float32, -bound, bound)
        return w, b

    keys = jax.random.split(key, 8)
    qw1, qb1 = linear(keys[0], input_size + conditioning_size, encoder_hidden_size)
    qw21, qb21 = linear(keys[1], encoder_hidden_size, latent_size)
    qw22, qb22 = linear(keys[2], encoder_hidden_size, latent_size)
    pw1, pb1 = linear(keys[3], conditioning_size, prior_hidden_size)
    pw21, pb21 = linear(keys[4], prior_hidden_size, latent_size)
    pw22, pb22 = linear(keys[5], prior_hidden_size, latent_size)
    w3, b3 = linear(keys[6], latent_size + conditioning_size, decoder_hidden_size)
    w4, b4 = linear(keys[7], decoder_hidden_size, input_size)

    bf16 = jnp.bfloat16
    return dict(
        qw1_s=qw1[:input_size].astype(bf16),
        qw1_c=qw1[input_size:].astype(bf16),
        qb1=qb1,
        qw2=jnp.concatenate([qw21, qw22], axis=1).astype(bf16),
        qb2=jnp.concatenate([qb21, qb22], axis=1),
        pw1=pw1.astype(bf16), pb1=pb1,
        pw2=jnp.concatenate([pw21, pw22], axis=1).astype(bf16),
        pb2=jnp.concatenate([pb21, pb22], axis=1),
        w3_z=w3[:latent_size].astype(bf16),
        w3_c=w3[latent_size:].astype(bf16),
        b3=b3,
        w4=w4.astype(bf16), b4=b4,
    )


def _choose_tiling(B):
    """TB multiple of 8, minimal batch padding, tiles <= 1024 rows, and
    (when batch allows) >= 2 grid steps so v7x's 2nd TensorCore gets work."""
    B8 = _round_up(max(B, 1), 8)
    if B8 <= 8:
        return B8, B8
    num_tiles = max(2, _cdiv(B8, 1024))
    TB = _round_up(_cdiv(B8, num_tiles), 8)
    return TB, TB * num_tiles


@jax.jit
def cvae_forward(s, c, eps, params):
    B, input_size = s.shape
    cond = c.shape[1]
    latent = eps.shape[1]
    enc_hidden = params["qw1_s"].shape[1]
    prior_hidden = params["pw1"].shape[1]
    dec_hidden = params["w3_z"].shape[1]

    TB, B_pad = _choose_tiling(B)

    def pad_b(x):
        return jnp.pad(x, ((0, B_pad - B), (0, 0))) if B_pad != B else x

    s_p, c_p, eps_p = pad_b(s), pad_b(c), pad_b(eps)

    total = input_size + 4 * latent + enc_hidden + dec_hidden
    out_pad = _round_up(total, 128)   # lane-dense output slab

    weights = (params["qw1_s"], params["qw1_c"], params["qb1"],
               params["qw2"], params["qb2"],
               params["pw1"], params["pb1"], params["pw2"], params["pb2"],
               params["w3_z"], params["w3_c"], params["b3"],
               params["w4"], params["b4"])

    batched_specs = [
        pl.BlockSpec((TB, input_size), lambda i: (i, 0)),
        pl.BlockSpec((TB, cond), lambda i: (i, 0)),
        pl.BlockSpec((TB, latent), lambda i: (i, 0)),
    ]
    # Weights/biases: full-array blocks, VMEM-resident across the grid.
    weight_specs = [pl.BlockSpec(w.shape, lambda i: (0, 0)) for w in weights]

    flops = 2 * B_pad * (input_size * enc_hidden + cond * enc_hidden
                         + enc_hidden * 2 * latent
                         + cond * prior_hidden
                         + prior_hidden * 2 * latent
                         + latent * dec_hidden + cond * dec_hidden
                         + dec_hidden * input_size)
    bytes_accessed = (int(s_p.size + c_p.size + eps_p.size) * 4
                      + int(B_pad) * int(out_pad) * 4
                      + sum(int(w.size) * w.dtype.itemsize for w in weights))
    cost = pl.CostEstimate(flops=flops,
                           transcendentals=B_pad * latent,
                           bytes_accessed=bytes_accessed)

    kernel = functools.partial(_cvae_kernel, latent_size=latent)

    slab = pl.pallas_call(
        kernel,
        out_shape=jax.ShapeDtypeStruct((B_pad, out_pad), jnp.float32),
        grid=(B_pad // TB,),
        in_specs=batched_specs + weight_specs,
        out_specs=pl.BlockSpec((TB, out_pad), lambda i: (i, 0)),
        compiler_params=pltpu.CompilerParams(
            dimension_semantics=("parallel",)),
        cost_estimate=cost,
    )(s_p, c_p, eps_p, *weights)

    slab = slab[:B]
    o = 0
    s_rec = slab[:, o:o + input_size];      o += input_size
    q_mean = slab[:, o:o + latent];         o += latent
    q_logvar = slab[:, o:o + latent];       o += latent
    h_enc = slab[:, o:o + enc_hidden];      o += enc_hidden
    p_mean = slab[:, o:o + latent];         o += latent
    p_logvar = slab[:, o:o + latent];       o += latent
    h_dec = slab[:, o:o + dec_hidden]
    return s_rec, q_mean, q_logvar, h_enc, p_mean, p_logvar, h_dec


def cvae_forward_ref(s, c, eps, params):
    """Pure-JAX reference mirroring the kernel's bf16-matmul / f32-elementwise math."""
    def mm(x, w):
        return jnp.dot(x.astype(jnp.bfloat16), w, preferred_element_type=jnp.float32)

    L = eps.shape[1]
    h_enc = jnp.maximum(mm(s, params["qw1_s"]) + mm(c, params["qw1_c"])
                        + params["qb1"], 0.0)
    q_ml = mm(h_enc, params["qw2"]) + params["qb2"]
    q_mean, q_logvar = q_ml[:, :L], q_ml[:, L:]
    h_p = jnp.maximum(mm(c, params["pw1"]) + params["pb1"], 0.0)
    p_ml = mm(h_p, params["pw2"]) + params["pb2"]
    p_mean, p_logvar = p_ml[:, :L], p_ml[:, L:]
    z = jnp.exp(0.5 * q_logvar) * eps + q_mean
    h_dec = jnp.maximum(mm(z, params["w3_z"]) + mm(c, params["w3_c"])
                        + params["b3"], 0.0)
    s_rec = mm(h_dec, params["w4"]) + params["b4"]
    return s_rec, q_mean, q_logvar, h_enc, p_mean, p_logvar, h_dec


if __name__ == "__main__":
    # Small, forward-consistent shapes (kernel also handles large batches via the grid).
    B = 8
    input_size = 16
    conditioning_size = 8
    latent_size = 8
    encoder_hidden_size = 32
    prior_hidden_size = 32
    decoder_hidden_size = 32

    key = jax.random.PRNGKey(0)
    k_s, k_c, k_eps, k_params = jax.random.split(key, 4)

    s = jax.random.normal(k_s, (B, input_size), jnp.float32)
    c = jax.random.normal(k_c, (B, conditioning_size), jnp.float32)
    eps = jax.random.normal(k_eps, (B, latent_size), jnp.float32)

    params = init_cvae_params(
        k_params, input_size, conditioning_size, latent_size,
        encoder_hidden_size, prior_hidden_size, decoder_hidden_size,
    )

    outs = cvae_forward(s, c, eps, params)
    outs = jax.block_until_ready(outs)

    refs = cvae_forward_ref(s, c, eps, params)
    for o, r in zip(outs, refs):
        assert o.shape == r.shape and o.dtype == r.dtype
        assert jnp.allclose(o, r, atol=2e-2, rtol=2e-2), float(jnp.max(jnp.abs(o - r)))

    print("KERNEL_OK")
</pallas_src>

<mosaic_0001>
module attributes {stable_mosaic.version = 11 : i64} {
  func.func @_cvae_kernel(%arg0: i32, %arg1: memref<8x16xf32, #tpu.memory_space<vmem>>, %arg2: memref<8x8xf32, #tpu.memory_space<vmem>>, %arg3: memref<8x8xf32, #tpu.memory_space<vmem>>, %arg4: memref<16x32xbf16, #tpu.memory_space<vmem>>, %arg5: memref<8x32xbf16, #tpu.memory_space<vmem>>, %arg6: memref<1x32xf32, #tpu.memory_space<vmem>>, %arg7: memref<32x16xbf16, #tpu.memory_space<vmem>>, %arg8: memref<1x16xf32, #tpu.memory_space<vmem>>, %arg9: memref<8x32xbf16, #tpu.memory_space<vmem>>, %arg10: memref<1x32xf32, #tpu.memory_space<vmem>>, %arg11: memref<32x16xbf16, #tpu.memory_space<vmem>>, %arg12: memref<1x16xf32, #tpu.memory_space<vmem>>, %arg13: memref<8x32xbf16, #tpu.memory_space<vmem>>, %arg14: memref<8x32xbf16, #tpu.memory_space<vmem>>, %arg15: memref<1x32xf32, #tpu.memory_space<vmem>>, %arg16: memref<32x16xbf16, #tpu.memory_space<vmem>>, %arg17: memref<1x16xf32, #tpu.memory_space<vmem>>, %arg18: memref<8x128xf32, #tpu.memory_space<vmem>>) attributes {dimension_semantics = [#tpu.dimension_semantics<parallel>], iteration_bounds = array<i64: 1>, scalar_prefetch = 0 : i64, scratch_operands = 0 : i64, tpu.core_type = #tpu.core_type<tc>, window_params = [{transform_indices = @transform_0, window_bounds = array<i64: 8, 16>}, {transform_indices = @transform_1, window_bounds = array<i64: 8, 8>}, {transform_indices = @transform_2, window_bounds = array<i64: 8, 8>}, {pipeline_mode = #tpu.pipeline_mode<synchronous>, transform_indices = @transform_3, window_bounds = array<i64: 16, 32>}, {pipeline_mode = #tpu.pipeline_mode<synchronous>, transform_indices = @transform_4, window_bounds = array<i64: 8, 32>}, {pipeline_mode = #tpu.pipeline_mode<synchronous>, transform_indices = @transform_5, window_bounds = array<i64: 1, 32>}, {pipeline_mode = #tpu.pipeline_mode<synchronous>, transform_indices = @transform_6, window_bounds = array<i64: 32, 16>}, {pipeline_mode = #tpu.pipeline_mode<synchronous>, transform_indices = @transform_7, window_bounds = array<i64: 1, 16>}, {pipeline_mode = #tpu.pipeline_mode<synchronous>, transform_indices = @transform_8, window_bounds = array<i64: 8, 32>}, {pipeline_mode = #tpu.pipeline_mode<synchronous>, transform_indices = @transform_9, window_bounds = array<i64: 1, 32>}, {pipeline_mode = #tpu.pipeline_mode<synchronous>, transform_indices = @transform_10, window_bounds = array<i64: 32, 16>}, {pipeline_mode = #tpu.pipeline_mode<synchronous>, transform_indices = @transform_11, window_bounds = array<i64: 1, 16>}, {pipeline_mode = #tpu.pipeline_mode<synchronous>, transform_indices = @transform_12, window_bounds = array<i64: 8, 32>}, {pipeline_mode = #tpu.pipeline_mode<synchronous>, transform_indices = @transform_13, window_bounds = array<i64: 8, 32>}, {pipeline_mode = #tpu.pipeline_mode<synchronous>, transform_indices = @transform_14, window_bounds = array<i64: 1, 32>}, {pipeline_mode = #tpu.pipeline_mode<synchronous>, transform_indices = @transform_15, window_bounds = array<i64: 32, 16>}, {pipeline_mode = #tpu.pipeline_mode<synchronous>, transform_indices = @transform_16, window_bounds = array<i64: 1, 16>}, {transform_indices = @transform_17, window_bounds = array<i64: 8, 128>}]} {
    %c0 = arith.constant 0 : index
    %c0_0 = arith.constant 0 : index
    %0 = vector.load %arg1[%c0, %c0_0] : memref<8x16xf32, #tpu.memory_space<vmem>>, vector<8x16xf32>
    %1 = arith.truncf %0 : vector<8x16xf32> to vector<8x16xbf16>
    %c0_1 = arith.constant 0 : index
    %c0_2 = arith.constant 0 : index
    %2 = vector.load %arg2[%c0_1, %c0_2] : memref<8x8xf32, #tpu.memory_space<vmem>>, vector<8x8xf32>
    %3 = arith.truncf %2 : vector<8x8xf32> to vector<8x8xbf16>
    %c0_3 = arith.constant 0 : index
    %c0_4 = arith.constant 0 : index
    %4 = vector.load %arg3[%c0_3, %c0_4] : memref<8x8xf32, #tpu.memory_space<vmem>>, vector<8x8xf32>
    %c0_5 = arith.constant 0 : index
    %c0_6 = arith.constant 0 : index
    %5 = vector.load %arg4[%c0_5, %c0_6] : memref<16x32xbf16, #tpu.memory_space<vmem>>, vector<16x32xbf16>
    %cst = arith.constant dense<0.000000e+00> : vector<8x32xf32>
    %6 = tpu.matmul %1, %5, %cst {dimension_numbers = #tpu.dot_dimension_numbers<[1], [0], [0], [1], [0, 0, 1, 1], [], []>} : vector<8x16xbf16>, vector<16x32xbf16>, vector<8x32xf32> -> vector<8x32xf32>
    %c0_7 = arith.constant 0 : index
    %c0_8 = arith.constant 0 : index
    %7 = vector.load %arg5[%c0_7, %c0_8] : memref<8x32xbf16, #tpu.memory_space<vmem>>, vector<8x32xbf16>
    %cst_9 = arith.constant dense<0.000000e+00> : vector<8x32xf32>
    %8 = tpu.matmul %3, %7, %cst_9 {dimension_numbers = #tpu.dot_dimension_numbers<[1], [0], [0], [1], [0, 0, 1, 1], [], []>} : vector<8x8xbf16>, vector<8x32xbf16>, vector<8x32xf32> -> vector<8x32xf32>
    %9 = arith.addf %6, %8 : vector<8x32xf32>
    %c0_10 = arith.constant 0 : index
    %c0_11 = arith.constant 0 : index
    %10 = vector.load %arg6[%c0_10, %c0_11] : memref<1x32xf32, #tpu.memory_space<vmem>>, vector<1x32xf32>
    %11 = vector.broadcast %10 : vector<1x32xf32> to vector<8x32xf32>
    %12 = arith.addf %9, %11 : vector<8x32xf32>
    %cst_12 = arith.constant 0.000000e+00 : f32
    %13 = vector.broadcast %cst_12 : f32 to vector<8x32xf32>
    %14 = arith.maximumf %12, %13 : vector<8x32xf32>
    %15 = arith.truncf %14 : vector<8x32xf32> to vector<8x32xbf16>
    %c0_13 = arith.constant 0 : index
    %c0_14 = arith.constant 0 : index
    %16 = vector.load %arg7[%c0_13, %c0_14] : memref<32x16xbf16, #tpu.memory_space<vmem>>, vector<32x16xbf16>
    %cst_15 = arith.constant dense<0.000000e+00> : vector<8x16xf32>
    %17 = tpu.matmul %15, %16, %cst_15 {dimension_numbers = #tpu.dot_dimension_numbers<[1], [0], [0], [1], [0, 0, 1, 1], [], []>} : vector<8x32xbf16>, vector<32x16xbf16>, vector<8x16xf32> -> vector<8x16xf32>
    %c0_16 = arith.constant 0 : index
    %c0_17 = arith.constant 0 : index
    %18 = vector.load %arg8[%c0_16, %c0_17] : memref<1x16xf32, #tpu.memory_space<vmem>>, vector<1x16xf32>
    %19 = vector.broadcast %18 : vector<1x16xf32> to vector<8x16xf32>
    %20 = arith.addf %17, %19 : vector<8x16xf32>
    %21 = vector.extract_strided_slice %20 {offsets = [0, 0], sizes = [8, 8], strides = [1, 1]} : vector<8x16xf32> to vector<8x8xf32>
    %22 = vector.extract_strided_slice %20 {offsets = [0, 8], sizes = [8, 8], strides = [1, 1]} : vector<8x16xf32> to vector<8x8xf32>
    %c0_18 = arith.constant 0 : index
    %c0_19 = arith.constant 0 : index
    %23 = vector.load %arg9[%c0_18, %c0_19] : memref<8x32xbf16, #tpu.memory_space<vmem>>, vector<8x32xbf16>
    %cst_20 = arith.constant dense<0.000000e+00> : vector<8x32xf32>
    %24 = tpu.matmul %3, %23, %cst_20 {dimension_numbers = #tpu.dot_dimension_numbers<[1], [0], [0], [1], [0, 0, 1, 1], [], []>} : vector<8x8xbf16>, vector<8x32xbf16>, vector<8x32xf32> -> vector<8x32xf32>
    %c0_21 = arith.constant 0 : index
    %c0_22 = arith.constant 0 : index
    %25 = vector.load %arg10[%c0_21, %c0_22] : memref<1x32xf32, #tpu.memory_space<vmem>>, vector<1x32xf32>
    %26 = vector.broadcast %25 : vector<1x32xf32> to vector<8x32xf32>
    %27 = arith.addf %24, %26 : vector<8x32xf32>
    %cst_23 = arith.constant 0.000000e+00 : f32
    %28 = vector.broadcast %cst_23 : f32 to vector<8x32xf32>
    %29 = arith.maximumf %27, %28 : vector<8x32xf32>
    %30 = arith.truncf %29 : vector<8x32xf32> to vector<8x32xbf16>
    %c0_24 = arith.constant 0 : index
    %c0_25 = arith.constant 0 : index
    %31 = vector.load %arg11[%c0_24, %c0_25] : memref<32x16xbf16, #tpu.memory_space<vmem>>, vector<32x16xbf16>
    %cst_26 = arith.constant dense<0.000000e+00> : vector<8x16xf32>
    %32 = tpu.matmul %30, %31, %cst_26 {dimension_numbers = #tpu.dot_dimension_numbers<[1], [0], [0], [1], [0, 0, 1, 1], [], []>} : vector<8x32xbf16>, vector<32x16xbf16>, vector<8x16xf32> -> vector<8x16xf32>
    %c0_27 = arith.constant 0 : index
    %c0_28 = arith.constant 0 : index
    %33 = vector.load %arg12[%c0_27, %c0_28] : memref<1x16xf32, #tpu.memory_space<vmem>>, vector<1x16xf32>
    %34 = vector.broadcast %33 : vector<1x16xf32> to vector<8x16xf32>
    %35 = arith.addf %32, %34 : vector<8x16xf32>
    %cst_29 = arith.constant 5.000000e-01 : f32
    %36 = vector.broadcast %cst_29 : f32 to vector<8x8xf32>
    %37 = arith.mulf %36, %22 : vector<8x8xf32>
    %38 = math.exp %37 : vector<8x8xf32>
    %39 = arith.mulf %38, %4 : vector<8x8xf32>
    %40 = arith.addf %39, %21 : vector<8x8xf32>
    %41 = arith.truncf %40 : vector<8x8xf32> to vector<8x8xbf16>
    %c0_30 = arith.constant 0 : index
    %c0_31 = arith.constant 0 : index
    %42 = vector.load %arg13[%c0_30, %c0_31] : memref<8x32xbf16, #tpu.memory_space<vmem>>, vector<8x32xbf16>
    %cst_32 = arith.constant dense<0.000000e+00> : vector<8x32xf32>
    %43 = tpu.matmul %41, %42, %cst_32 {dimension_numbers = #tpu.dot_dimension_numbers<[1], [0], [0], [1], [0, 0, 1, 1], [], []>} : vector<8x8xbf16>, vector<8x32xbf16>, vector<8x32xf32> -> vector<8x32xf32>
    %c0_33 = arith.constant 0 : index
    %c0_34 = arith.constant 0 : index
    %44 = vector.load %arg14[%c0_33, %c0_34] : memref<8x32xbf16, #tpu.memory_space<vmem>>, vector<8x32xbf16>
    %cst_35 = arith.constant dense<0.000000e+00> : vector<8x32xf32>
    %45 = tpu.matmul %3, %44, %cst_35 {dimension_numbers = #tpu.dot_dimension_numbers<[1], [0], [0], [1], [0, 0, 1, 1], [], []>} : vector<8x8xbf16>, vector<8x32xbf16>, vector<8x32xf32> -> vector<8x32xf32>
    %46 = arith.addf %43, %45 : vector<8x32xf32>
    %c0_36 = arith.constant 0 : index
    %c0_37 = arith.constant 0 : index
    %47 = vector.load %arg15[%c0_36, %c0_37] : memref<1x32xf32, #tpu.memory_space<vmem>>, vector<1x32xf32>
    %48 = vector.broadcast %47 : vector<1x32xf32> to vector<8x32xf32>
    %49 = arith.addf %46, %48 : vector<8x32xf32>
    %cst_38 = arith.constant 0.000000e+00 : f32
    %50 = vector.broadcast %cst_38 : f32 to vector<8x32xf32>
    %51 = arith.maximumf %49, %50 : vector<8x32xf32>
    %52 = arith.truncf %51 : vector<8x32xf32> to vector<8x32xbf16>
    %c0_39 = arith.constant 0 : index
    %c0_40 = arith.constant 0 : index
    %53 = vector.load %arg16[%c0_39, %c0_40] : memref<32x16xbf16, #tpu.memory_space<vmem>>, vector<32x16xbf16>
    %cst_41 = arith.constant dense<0.000000e+00> : vector<8x16xf32>
    %54 = tpu.matmul %52, %53, %cst_41 {dimension_numbers = #tpu.dot_dimension_numbers<[1], [0], [0], [1], [0, 0, 1, 1], [], []>} : vector<8x32xbf16>, vector<32x16xbf16>, vector<8x16xf32> -> vector<8x16xf32>
    %c0_42 = arith.constant 0 : index
    %c0_43 = arith.constant 0 : index
    %55 = vector.load %arg17[%c0_42, %c0_43] : memref<1x16xf32, #tpu.memory_space<vmem>>, vector<1x16xf32>
    %56 = vector.broadcast %55 : vector<1x16xf32> to vector<8x16xf32>
    %57 = arith.addf %54, %56 : vector<8x16xf32>
    %58 = vector.extract_strided_slice %35 {offsets = [0, 0], sizes = [8, 8], strides = [1, 1]} : vector<8x16xf32> to vector<8x8xf32>
    %59 = vector.extract_strided_slice %35 {offsets = [0, 8], sizes = [8, 8], strides = [1, 1]} : vector<8x16xf32> to vector<8x8xf32>
    %cst_44 = arith.constant 0.000000e+00 : f32
    %60 = vector.broadcast %cst_44 : f32 to vector<8x16xf32>
    %61 = tpu.concatenate %57, %21, %22, %14, %58, %59, %51, %60 in 1 : vector<8x16xf32>, vector<8x8xf32>, vector<8x8xf32>, vector<8x32xf32>, vector<8x8xf32>, vector<8x8xf32>, vector<8x32xf32>, vector<8x16xf32> -> vector<8x128xf32>
    %c0_45 = arith.constant 0 : index
    %c0_46 = arith.constant 0 : index
    %62 = vector.load %arg18[%c0_45, %c0_46] : memref<8x128xf32, #tpu.memory_space<vmem>>, vector<8x128xf32>
    tpu.vector_store %arg18[%c0_45, %c0_46], %61 {strides = array<i32>} : memref<8x128xf32, #tpu.memory_space<vmem>>, vector<8x128xf32>,
    return
  }
  func.func @transform_0(%arg0: i32) -> (i32, i32) {
    %c0_i32 = arith.constant 0 : i32
    %c0_i32_0 = arith.constant 0 : i32
    return %arg0, %c0_i32 : i32, i32
  }
  func.func @transform_1(%arg0: i32) -> (i32, i32) {
    %c0_i32 = arith.constant 0 : i32
    %c0_i32_0 = arith.constant 0 : i32
    return %arg0, %c0_i32 : i32, i32
  }
  func.func @transform_2(%arg0: i32) -> (i32, i32) {
    %c0_i32 = arith.constant 0 : i32
    %c0_i32_0 = arith.constant 0 : i32
    return %arg0, %c0_i32 : i32, i32
  }
  func.func @transform_3(%arg0: i32) -> (i32, i32) {
    %c0_i32 = arith.constant 0 : i32
    %c0_i32_0 = arith.constant 0 : i32
    %c0_i32_1 = arith.constant 0 : i32
    return %c0_i32, %c0_i32_0 : i32, i32
  }
  func.func @transform_4(%arg0: i32) -> (i32, i32) {
    %c0_i32 = arith.constant 0 : i32
    %c0_i32_0 = arith.constant 0 : i32
    %c0_i32_1 = arith.constant 0 : i32
    return %c0_i32, %c0_i32_0 : i32, i32
  }
  func.func @transform_5(%arg0: i32) -> (i32, i32) {
    %c0_i32 = arith.constant 0 : i32
    %c0_i32_0 = arith.constant 0 : i32
    %c0_i32_1 = arith.constant 0 : i32
    return %c0_i32, %c0_i32_0 : i32, i32
  }
  func.func @transform_6(%arg0: i32) -> (i32, i32) {
    %c0_i32 = arith.constant 0 : i32
    %c0_i32_0 = arith.constant 0 : i32
    %c0_i32_1 = arith.constant 0 : i32
    return %c0_i32, %c0_i32_0 : i32, i32
  }
  func.func @transform_7(%arg0: i32) -> (i32, i32) {
    %c0_i32 = arith.constant 0 : i32
    %c0_i32_0 = arith.constant 0 : i32
    %c0_i32_1 = arith.constant 0 : i32
    return %c0_i32, %c0_i32_0 : i32, i32
  }
  func.func @transform_8(%arg0: i32) -> (i32, i32) {
    %c0_i32 = arith.constant 0 : i32
    %c0_i32_0 = arith.constant 0 : i32
    %c0_i32_1 = arith.constant 0 : i32
    return %c0_i32, %c0_i32_0 : i32, i32
  }
  func.func @transform_9(%arg0: i32) -> (i32, i32) {
    %c0_i32 = arith.constant 0 : i32
    %c0_i32_0 = arith.constant 0 : i32
    %c0_i32_1 = arith.constant 0 : i32
    return %c0_i32, %c0_i32_0 : i32, i32
  }
  func.func @transform_10(%arg0: i32) -> (i32, i32) {
    %c0_i32 = arith.constant 0 : i32
    %c0_i32_0 = arith.constant 0 : i32
    %c0_i32_1 = arith.constant 0 : i32
    return %c0_i32, %c0_i32_0 : i32, i32
  }
  func.func @transform_11(%arg0: i32) -> (i32, i32) {
    %c0_i32 = arith.constant 0 : i32
    %c0_i32_0 = arith.constant 0 : i32
    %c0_i32_1 = arith.constant 0 : i32
    return %c0_i32, %c0_i32_0 : i32, i32
  }
  func.func @transform_12(%arg0: i32) -> (i32, i32) {
    %c0_i32 = arith.constant 0 : i32
    %c0_i32_0 = arith.constant 0 : i32
    %c0_i32_1 = arith.constant 0 : i32
    return %c0_i32, %c0_i32_0 : i32, i32
  }
  func.func @transform_13(%arg0: i32) -> (i32, i32) {
    %c0_i32 = arith.constant 0 : i32
    %c0_i32_0 = arith.constant 0 : i32
    %c0_i32_1 = arith.constant 0 : i32
    return %c0_i32, %c0_i32_0 : i32, i32
  }
  func.func @transform_14(%arg0: i32) -> (i32, i32) {
    %c0_i32 = arith.constant 0 : i32
    %c0_i32_0 = arith.constant 0 : i32
    %c0_i32_1 = arith.constant 0 : i32
    return %c0_i32, %c0_i32_0 : i32, i32
  }
  func.func @transform_15(%arg0: i32) -> (i32, i32) {
    %c0_i32 = arith.constant 0 : i32
    %c0_i32_0 = arith.constant 0 : i32
    %c0_i32_1 = arith.constant 0 : i32
    return %c0_i32, %c0_i32_0 : i32, i32
  }
  func.func @transform_16(%arg0: i32) -> (i32, i32) {
    %c0_i32 = arith.constant 0 : i32
    %c0_i32_0 = arith.constant 0 : i32
    %c0_i32_1 = arith.constant 0 : i32
    return %c0_i32, %c0_i32_0 : i32, i32
  }
  func.func @transform_17(%arg0: i32) -> (i32, i32) {
    %c0_i32 = arith.constant 0 : i32
    %c0_i32_0 = arith.constant 0 : i32
    return %arg0, %c0_i32 : i32, i32
  }
}

</mosaic_0001>

<llo_original>
// kernel: cvae_forward.1
$region0: #{cvae_forward.1}
  #allocation0 [shape = 'u32[]', space=smem, size = 0x4, offset = 0x4, fixed_abs, tag = 'smem constant byte address 0x4 - core index']
  #allocation1 [shape = 'u32[144,128]{1,0:T(1,128)}', space=vmem, size = 0x12000, scoped, tag = 'internal scratch']
  %s0 = inlined_call_operand.vmem [shape: f32[8,16], index: 0, kind: input, shape index: {}]
  %s1 = inlined_call_operand.vmem [shape: f32[8,8], index: 1, kind: input, shape index: {}]
  %s2 = inlined_call_operand.vmem [shape: f32[8,8], index: 2, kind: input, shape index: {}]
  %s3 = inlined_call_operand.vmem [shape: bf16[16,32], index: 3, kind: input, shape index: {}]
  %s4 = inlined_call_operand.vmem [shape: bf16[8,32], index: 4, kind: input, shape index: {}]
  %s5 = inlined_call_operand.vmem [shape: f32[1,32], index: 5, kind: input, shape index: {}]
  %s6 = inlined_call_operand.vmem [shape: bf16[32,16], index: 6, kind: input, shape index: {}]
  %s7 = inlined_call_operand.vmem [shape: f32[1,16], index: 7, kind: input, shape index: {}]
  %s8 = inlined_call_operand.vmem [shape: bf16[8,32], index: 8, kind: input, shape index: {}]
  %s9 = inlined_call_operand.vmem [shape: f32[1,32], index: 9, kind: input, shape index: {}]
  %s10 = inlined_call_operand.vmem [shape: bf16[32,16], index: 10, kind: input, shape index: {}]
  %s11 = inlined_call_operand.vmem [shape: f32[1,16], index: 11, kind: input, shape index: {}]
  %s12 = inlined_call_operand.vmem [shape: bf16[8,32], index: 12, kind: input, shape index: {}]
  %s13 = inlined_call_operand.vmem [shape: bf16[8,32], index: 13, kind: input, shape index: {}]
  %s14 = inlined_call_operand.vmem [shape: f32[1,32], index: 14, kind: input, shape index: {}]
  %s15 = inlined_call_operand.vmem [shape: bf16[32,16], index: 15, kind: input, shape index: {}]
  %s16 = inlined_call_operand.vmem [shape: f32[1,16], index: 16, kind: input, shape index: {}]
  %s17 = inlined_call_operand.vmem [shape: f32[8,128], index: 17, kind: output, shape index: {}]
  %s18 = sld [smem:[#allocation0]]
  $region78: #{cvae_forward.1} parent=0
    _
  %s20 = ssub.s32 1, %s18
  %s21 = scalar_select 0, %s20, %s18
  // Predicated region
  $region2: #{cvae_forward.1} parent=0 // pred_check
    _
  $region3: #{cvae_forward.1} parent=0 // pred_check_branch
    %23 = sbr.rel (0) target = $region5
  $region4: #{cvae_forward.1} parent=0 // pred_region
    _
  $region5: #{cvae_forward.1} parent=0 // pred_fallthru
    _
  // Predicated region
  $region6: #{cvae_forward.1} parent=0 // pred_check
    _
  $region7: #{cvae_forward.1} parent=0 // pred_check_branch
    %25 = sbr.rel (0) target = $region9
  $region8: #{cvae_forward.1} parent=0 // pred_region
    _
  $region9: #{cvae_forward.1} parent=0 // pred_fallthru
    _
  // Predicated region
  $region10: #{cvae_forward.1} parent=0 // pred_check
    _
  $region11: #{cvae_forward.1} parent=0 // pred_check_branch
    %27 = sbr.rel (0) target = $region13
  $region12: #{cvae_forward.1} parent=0 // pred_region
    _
  $region13: #{cvae_forward.1} parent=0 // pred_fallthru
    _
  // Predicated region
  $region14: #{cvae_forward.1} parent=0 // pred_check
    _
  $region15: #{cvae_forward.1} parent=0 // pred_check_branch
    %29 = sbr.rel (0) target = $region17
  $region16: #{cvae_forward.1} parent=0 // pred_region
    _
  $region17: #{cvae_forward.1} parent=0 // pred_fallthru
    _
  // Predicated region
  $region18: #{cvae_forward.1} parent=0 // pred_check
    _
  $region19: #{cvae_forward.1} parent=0 // pred_check_branch
    %31 = sbr.rel (0) target = $region21
  $region20: #{cvae_forward.1} parent=0 // pred_region
    _
  $region21: #{cvae_forward.1} parent=0 // pred_fallthru
    _
  // Predicated region
  $region22: #{cvae_forward.1} parent=0 // pred_check
    _
  $region23: #{cvae_forward.1} parent=0 // pred_check_branch
    %33 = sbr.rel (0) target = $region25
  $region24: #{cvae_forward.1} parent=0 // pred_region
    _
  $region25: #{cvae_forward.1} parent=0 // pred_fallthru
    _
  // Predicated region
  $region26: #{cvae_forward.1} parent=0 // pred_check
    _
  $region27: #{cvae_forward.1} parent=0 // pred_check_branch
    %35 = sbr.rel (0) target = $region29
  $region28: #{cvae_forward.1} parent=0 // pred_region
    _
  $region29: #{cvae_forward.1} parent=0 // pred_fallthru
    _
  // Predicated region
  $region30: #{cvae_forward.1} parent=0 // pred_check
    _
  $region31: #{cvae_forward.1} parent=0 // pred_check_branch
    %37 = sbr.rel (0) target = $region33
  $region32: #{cvae_forward.1} parent=0 // pred_region
    _
  $region33: #{cvae_forward.1} parent=0 // pred_fallthru
    _
  // Predicated region
  $region34: #{cvae_forward.1} parent=0 // pred_check
    _
  $region35: #{cvae_forward.1} parent=0 // pred_check_branch
    %39 = sbr.rel (0) target = $region37
  $region36: #{cvae_forward.1} parent=0 // pred_region
    _
  $region37: #{cvae_forward.1} parent=0 // pred_fallthru
    _
  // Predicated region
  $region38: #{cvae_forward.1} parent=0 // pred_check
    _
  $region39: #{cvae_forward.1} parent=0 // pred_check_branch
    %41 = sbr.rel (0) target = $region41
  $region40: #{cvae_forward.1} parent=0 // pred_region
    _
  $region41: #{cvae_forward.1} parent=0 // pred_fallthru
    _
  // Predicated region
  $region42: #{cvae_forward.1} parent=0 // pred_check
    _
  $region43: #{cvae_forward.1} parent=0 // pred_check_branch
    %43 = sbr.rel (0) target = $region45
  $region44: #{cvae_forward.1} parent=0 // pred_region
    _
  $region45: #{cvae_forward.1} parent=0 // pred_fallthru
    _
  // Predicated region
  $region46: #{cvae_forward.1} parent=0 // pred_check
    _
  $region47: #{cvae_forward.1} parent=0 // pred_check_branch
    %45 = sbr.rel (0) target = $region49
  $region48: #{cvae_forward.1} parent=0 // pred_region
    _
  $region49: #{cvae_forward.1} parent=0 // pred_fallthru
    _
  // Predicated region
  $region50: #{cvae_forward.1} parent=0 // pred_check
    _
  $region51: #{cvae_forward.1} parent=0 // pred_check_branch
    %47 = sbr.rel (0) target = $region53
  $region52: #{cvae_forward.1} parent=0 // pred_region
    _
  $region53: #{cvae_forward.1} parent=0 // pred_fallthru
    _
  // Predicated region
  $region54: #{cvae_forward.1} parent=0 // pred_check
    _
  $region55: #{cvae_forward.1} parent=0 // pred_check_branch
    %49 = sbr.rel (0) target = $region57
  $region56: #{cvae_forward.1} parent=0 // pred_region
    _
  $region57: #{cvae_forward.1} parent=0 // pred_fallthru
    _
  // Predicated region
  $region58: #{cvae_forward.1} parent=0 // pred_check
    _
  $region59: #{cvae_forward.1} parent=0 // pred_check_branch
    %51 = sbr.rel (0) target = $region61
  $region60: #{cvae_forward.1} parent=0 // pred_region
    _
  $region61: #{cvae_forward.1} parent=0 // pred_fallthru
    _
  // Predicated region
  $region62: #{cvae_forward.1} parent=0 // pred_check
    _
  $region63: #{cvae_forward.1} parent=0 // pred_check_branch
    %53 = sbr.rel (0) target = $region65
  $region64: #{cvae_forward.1} parent=0 // pred_region
    _
  $region65: #{cvae_forward.1} parent=0 // pred_fallthru
    _
  // Predicated region
  $region66: #{cvae_forward.1} parent=0 // pred_check
    _
  $region67: #{cvae_forward.1} parent=0 // pred_check_branch
    %55 = sbr.rel (0) target = $region69
  $region68: #{cvae_forward.1} parent=0 // pred_region
    _
  $region69: #{cvae_forward.1} parent=0 // pred_fallthru
    _
  %v57 = vld [vmem:[%s0] sm:$0xff]
  %v58 = vpack.c.bf16 %v57, %v57
  %v59 = vld [vmem:[%s1] sm:$0xff]
  %v60 = vpack.c.bf16 %v59, %v59
  %v61 = vld [vmem:[%s2] sm:$0xff]
  %v62 = vld [vmem:[%s3] sm:$0xf]
  %v63 = vld [vmem:[%s3 + $0x4] sm:$0xf]
  %v64 = vld [vmem:[%s4] sm:$0xf]
  %vm65 = vcmask 64512
  %v67 = vsel %vm65, %v60, 0
  %vm69 = vcmask 1043456
  %v71 = vsel %vm69, %v64, 0
  %73 = vmatprep.subr.bf16.mxu0 0
  %74 = vmatpush1.bf16.msra.mxu0 %v71
  %75 = vmatprep.subr.bf16.mxu0 0
  %76 = vmatpush1.bf16.msra.mxu0 0
  %77 = vmatprep.subr.bf16.mxu0 0
  %78 = vmatpush1.bf16.msra.mxu0 0
  %79 = vmatprep.subr.bf16.mxu0 0
  %80 = vmatpush1.bf16.msra.mxu0 0
  %81 = vmatprep.subr.bf16.mxu0 0
  %82 = vmatpush1.bf16.msra.mxu0 0
  %83 = vmatprep.subr.bf16.mxu0 0
  %84 = vmatpush1.bf16.msra.mxu0 0
  %85 = vmatprep.subr.bf16.mxu0 0
  %86 = vmatpush1.bf16.msra.mxu0 0
  %87 = vmatprep.subr.bf16.mxu0 0
  %88 = vmatpush1.bf16.msra.mxu0 0
  %89 = vmatprep.subr.bf16.mxu0 0
  %90 = vmatpush1.bf16.msra.mxu0 0
  %91 = vmatprep.subr.bf16.mxu0 0
  %92 = vmatpush1.bf16.msra.mxu0 0
  %93 = vmatprep.subr.bf16.mxu0 0
  %94 = vmatpush1.bf16.msra.mxu0 0
  %95 = vmatprep.subr.bf16.mxu0 0
  %96 = vmatpush1.bf16.msra.mxu0 0
  %97 = vmatprep.subr.bf16.mxu0 0
  %98 = vmatpush1.bf16.msra.mxu0 0
  %99 = vmatprep.subr.bf16.mxu0 0
  %100 = vmatpush1.bf16.msra.mxu0 0
  %101 = vmatprep.subr.bf16.mxu0 0
  %102 = vmatpush1.bf16.msra.mxu0 0
  %103 = vmatprep.subr.bf16.mxu0 0
  %104 = vmatpush1.bf16.msra.mxu0 0
  %105 = vmatprep.mubr.bf16.mxu0 0
  %106 = vmatmul.mubr.bf16.gmra.mrb[0].mxu0 %v67
  %v107 = vpop.f32.mrb[0].mxu0
  %v108 = vadd.f32 0.0, %v107
  %v109 = vpop.f32.mrb[0].mxu0
  %v110 = vpop.f32.mrb[0].mxu0
  %v111 = vpop.f32.mrb[0].mxu0
  %112 = vdwg.mxu0
  %v115 = vunpack.c.l.b16 %v62
  %v116 = vunpack.c.l.b16 %v63
  %v117 = vpack.c.b16 %v116, %v115
  %vm119 = vcmask 130048
  %v121 = vsel %vm119, %v58, 0
  %123 = vmatprep.subr.bf16.mxu0 0
  %124 = vmatpush1.bf16.msra.mxu0 %v117
  %125 = vmatprep.subr.bf16.mxu0 0
  %126 = vmatpush1.bf16.msra.mxu0 0
  %127 = vmatprep.subr.bf16.mxu0 0
  %128 = vmatpush1.bf16.msra.mxu0 0
  %129 = vmatprep.subr.bf16.mxu0 0
  %130 = vmatpush1.bf16.msra.mxu0 0
  %131 = vmatprep.subr.bf16.mxu0 0
  %132 = vmatpush1.bf16.msra.mxu0 0
  %133 = vmatprep.subr.bf16.mxu0 0
  %134 = vmatpush1.bf16.msra.mxu0 0
  %135 = vmatprep.subr.bf16.mxu0 0
  %136 = vmatpush1.bf16.msra.mxu0 0
  %137 = vmatprep.subr.bf16.mxu0 0
  %138 = vmatpush1.bf16.msra.mxu0 0
  %139 = vmatprep.subr.bf16.mxu0 0
  %140 = vmatpush1.bf16.msra.mxu0 0
  %141 = vmatprep.subr.bf16.mxu0 0
  %142 = vmatpush1.bf16.msra.mxu0 0
  %143 = vmatprep.subr.bf16.mxu0 0
  %144 = vmatpush1.bf16.msra.mxu0 0
  %145 = vmatprep.subr.bf16.mxu0 0
  %146 = vmatpush1.bf16.msra.mxu0 0
  %147 = vmatprep.subr.bf16.mxu0 0
  %148 = vmatpush1.bf16.msra.mxu0 0
  %149 = vmatprep.subr.bf16.mxu0 0
  %150 = vmatpush1.bf16.msra.mxu0 0
  %151 = vmatprep.subr.bf16.mxu0 0
  %152 = vmatpush1.bf16.msra.mxu0 0
  %153 = vmatprep.subr.bf16.mxu0 0
  %154 = vmatpush1.bf16.msra.mxu0 0
  %155 = vmatprep.mubr.bf16.mxu0 0
  %156 = vmatmul.mubr.bf16.gmra.mrb[0].mxu0 %v121
  %v157 = vpop.f32.mrb[0].mxu0
  %v158 = vadd.f32 %v108, %v157
  %v159 = vpop.f32.mrb[0].mxu0
  %v160 = vpop.f32.mrb[0].mxu0
  %v161 = vpop.f32.mrb[0].mxu0
  %162 = vdwg.mxu0
  %v163 = vld [vmem:[%s5] sm:$0x1]
  %v165 = vlaneseq
  %v166 = vshrl.u32 %v165, 7
  %v167 = vsub.s32 0, %v166
  %v168 = vrot.slane %v163, %v167
  %v170 = vadd.f32 %v158, %v168
  %v171 = vmax.f32 %v170, 0.0
  %v172 = vpack.c.bf16 %v171, %v171
  %v173 = vld [vmem:[%s6] sm:$0xf]
  %v174 = vld [vmem:[%s6 + $0x4] sm:$0xf]
  %v175 = vld [vmem:[%s6 + $0x8] sm:$0xf]
  %v176 = vld [vmem:[%s6 + $0xc] sm:$0xf]
  %v177 = vld [vmem:[%s7] sm:$0x1]
  %v179 = vlaneseq
  %v180 = vshrl.u32 %v179, 7
  %v181 = vsub.s32 0, %v180
  %v182 = vrot.slane %v177, %v181
  %v188 = vunpack.c.l.b16 %v173
  %v189 = vunpack.c.l.b16 %v174
  %v190 = vunpack.c.l.b16 %v175
  %v191 = vunpack.c.l.b16 %v176
  %v192 = vpack.c.b16 %v189, %v188
  %v193 = vpack.c.b16 %v191, %v190
  %vm196 = vcmask 261120
  %v198 = vsel %vm196, %v172, 0
  %200 = vmatprep.subr.bf16.mxu0 0
  %201 = vmatpush1.bf16.msra.mxu0 %v192
  %202 = vmatprep.subr.bf16.mxu0 0
  %203 = vmatpush1.bf16.msra.mxu0 %v193
  %204 = vmatprep.subr.bf16.mxu0 0
  %205 = vmatpush1.bf16.msra.mxu0 0
  %206 = vmatprep.subr.bf16.mxu0 0
  %207 = vmatpush1.bf16.msra.mxu0 0
  %208 = vmatprep.subr.bf16.mxu0 0
  %209 = vmatpush1.bf16.msra.mxu0 0
  %210 = vmatprep.subr.bf16.mxu0 0
  %211 = vmatpush1.bf16.msra.mxu0 0
  %212 = vmatprep.subr.bf16.mxu0 0
  %213 = vmatpush1.bf16.msra.mxu0 0
  %214 = vmatprep.subr.bf16.mxu0 0
  %215 = vmatpush1.bf16.msra.mxu0 0
  %216 = vmatprep.subr.bf16.mxu0 0
  %217 = vmatpush1.bf16.msra.mxu0 0
  %218 = vmatprep.subr.bf16.mxu0 0
  %219 = vmatpush1.bf16.msra.mxu0 0
  %220 = vmatprep.subr.bf16.mxu0 0
  %221 = vmatpush1.bf16.msra.mxu0 0
  %222 = vmatprep.subr.bf16.mxu0 0
  %223 = vmatpush1.bf16.msra.mxu0 0
  %224 = vmatprep.subr.bf16.mxu0 0
  %225 = vmatpush1.bf16.msra.mxu0 0
  %226 = vmatprep.subr.bf16.mxu0 0
  %227 = vmatpush1.bf16.msra.mxu0 0
  %228 = vmatprep.subr.bf16.mxu0 0
  %229 = vmatpush1.bf16.msra.mxu0 0
  %230 = vmatprep.subr.bf16.mxu0 0
  %231 = vmatpush1.bf16.msra.mxu0 0
  %232 = vmatprep.mubr.bf16.mxu0 0
  %233 = vmatmul.mubr.bf16.gmra.mrb[0].mxu0 %v198
  %v234 = vpop.f32.mrb[0].mxu0
  %v235 = vadd.f32 %v182, %v234
  %v236 = vpop.f32.mrb[0].mxu0
  %v237 = vpop.f32.mrb[0].mxu0
  %v238 = vpop.f32.mrb[0].mxu0
  %239 = vdwg.mxu0
  %v240 = vld [vmem:[%s8] sm:$0xf]
  %v241 = vld [vmem:[%s9] sm:$0x1]
  %v243 = vlaneseq
  %v244 = vshrl.u32 %v243, 7
  %v245 = vsub.s32 0, %v244
  %v246 = vrot.slane %v241, %v245
  %v249 = vsel %vm69, %v240, 0
  %251 = vmatprep.subr.bf16.mxu0 0
  %252 = vmatpush1.bf16.msra.mxu0 %v249
  %253 = vmatprep.subr.bf16.mxu0 0
  %254 = vmatpush1.bf16.msra.mxu0 0
  %255 = vmatprep.subr.bf16.mxu0 0
  %256 = vmatpush1.bf16.msra.mxu0 0
  %257 = vmatprep.subr.bf16.mxu0 0
  %258 = vmatpush1.bf16.msra.mxu0 0
  %259 = vmatprep.subr.bf16.mxu0 0
  %260 = vmatpush1.bf16.msra.mxu0 0
  %261 = vmatprep.subr.bf16.mxu0 0
  %262 = vmatpush1.bf16.msra.mxu0 0
  %263 = vmatprep.subr.bf16.mxu0 0
  %264 = vmatpush1.bf16.msra.mxu0 0
  %265 = vmatprep.subr.bf16.mxu0 0
  %266 = vmatpush1.bf16.msra.mxu0 0
  %267 = vmatprep.subr.bf16.mxu0 0
  %268 = vmatpush1.bf16.msra.mxu0 0
  %269 = vmatprep.subr.bf16.mxu0 0
  %270 = vmatpush1.bf16.msra.mxu0 0
  %271 = vmatprep.subr.bf16.mxu0 0
  %272 = vmatpush1.bf16.msra.mxu0 0
  %273 = vmatprep.subr.bf16.mxu0 0
  %274 = vmatpush1.bf16.msra.mxu0 0
  %275 = vmatprep.subr.bf16.mxu0 0
  %276 = vmatpush1.bf16.msra.mxu0 0
  %277 = vmatprep.subr.bf16.mxu0 0
  %278 = vmatpush1.bf16.msra.mxu0 0
  %279 = vmatprep.subr.bf16.mxu0 0
  %280 = vmatpush1.bf16.msra.mxu0 0
  %281 = vmatprep.subr.bf16.mxu0 0
  %282 = vmatpush1.bf16.msra.mxu0 0
  %283 = vmatprep.mubr.bf16.mxu0 0
  %284 = vmatmul.mubr.bf16.gmra.mrb[0].mxu0 %v67
  %v285 = vpop.f32.mrb[0].mxu0
  %v286 = vadd.f32 %v246, %v285
  %v287 = vpop.f32.mrb[0].mxu0
  %v288 = vpop.f32.mrb[0].mxu0
  %v289 = vpop.f32.mrb[0].mxu0
  %290 = vdwg.mxu0
  %v291 = vmax.f32 %v286, 0.0
  %v292 = vpack.c.bf16 %v291, %v291
  %v293 = vld [vmem:[%s10] sm:$0xf]
  %v294 = vld [vmem:[%s10 + $0x4] sm:$0xf]
  %v295 = vld [vmem:[%s10 + $0x8] sm:$0xf]
  %v296 = vld [vmem:[%s10 + $0xc] sm:$0xf]
  %v297 = vld [vmem:[%s11] sm:$0x1]
  %v299 = vlaneseq
  %v300 = vshrl.u32 %v299, 7
  %v301 = vsub.s32 0, %v300
  %v302 = vrot.slane %v297, %v301
  %v308 = vunpack.c.l.b16 %v293
  %v309 = vunpack.c.l.b16 %v294
  %v310 = vunpack.c.l.b16 %v295
  %v311 = vunpack.c.l.b16 %v296
  %v312 = vpack.c.b16 %v309, %v308
  %v313 = vpack.c.b16 %v311, %v310
  %v317 = vsel %vm196, %v292, 0
  %319 = vmatprep.subr.bf16.mxu0 0
  %320 = vmatpush1.bf16.msra.mxu0 %v312
  %321 = vmatprep.subr.bf16.mxu0 0
  %322 = vmatpush1.bf16.msra.mxu0 %v313
  %323 = vmatprep.subr.bf16.mxu0 0
  %324 = vmatpush1.bf16.msra.mxu0 0
  %325 = vmatprep.subr.bf16.mxu0 0
  %326 = vmatpush1.bf16.msra.mxu0 0
  %327 = vmatprep.subr.bf16.mxu0 0
  %328 = vmatpush1.bf16.msra.mxu0 0
  %329 = vmatprep.subr.bf16.mxu0 0
  %330 = vmatpush1.bf16.msra.mxu0 0
  %331 = vmatprep.subr.bf16.mxu0 0
  %332 = vmatpush1.bf16.msra.mxu0 0
  %333 = vmatprep.subr.bf16.mxu0 0
  %334 = vmatpush1.bf16.msra.mxu0 0
  %335 = vmatprep.subr.bf16.mxu0 0
  %336 = vmatpush1.bf16.msra.mxu0 0
  %337 = vmatprep.subr.bf16.mxu0 0
  %338 = vmatpush1.bf16.msra.mxu0 0
  %339 = vmatprep.subr.bf16.mxu0 0
  %340 = vmatpush1.bf16.msra.mxu0 0
  %341 = vmatprep.subr.bf16.mxu0 0
  %342 = vmatpush1.bf16.msra.mxu0 0
  %343 = vmatprep.subr.bf16.mxu0 0
  %344 = vmatpush1.bf16.msra.mxu0 0
  %345 = vmatprep.subr.bf16.mxu0 0
  %346 = vmatpush1.bf16.msra.mxu0 0
  %347 = vmatprep.subr.bf16.mxu0 0
  %348 = vmatpush1.bf16.msra.mxu0 0
  %349 = vmatprep.subr.bf16.mxu0 0
  %350 = vmatpush1.bf16.msra.mxu0 0
  %351 = vmatprep.mubr.bf16.mxu0 0
  %352 = vmatmul.mubr.bf16.gmra.mrb[0].mxu0 %v317
  %v353 = vpop.f32.mrb[0].mxu0
  %v354 = vadd.f32 %v302, %v353
  %v355 = vpop.f32.mrb[0].mxu0
  %v356 = vpop.f32.mrb[0].mxu0
  %v357 = vpop.f32.mrb[0].mxu0
  %358 = vdwg.mxu0
  %v359 = vmul.f32 %v235, 0.5
  %v360 = vmul.f32 %v359, 1.442695
  %v361 = vpow.pop %v360
  %363 = vrot.lane.b32.xlu0 %v61, 8
  %v364 = vpop.permute.xlu0 %363
  %v366 = vmul.f32 %v361, %v364
  %368 = vrot.lane.b32.xlu0 %v235, 8
  %v369 = vpop.permute.xlu0 %368
  %v371 = vadd.f32 %v366, %v369
  %v372 = vpack.c.bf16 %v371, %v371
  %v373 = vld [vmem:[%s12] sm:$0xf]
  %v374 = vld [vmem:[%s13] sm:$0xf]
  %v376 = vsel %vm69, %v374, 0
  %378 = vmatprep.subr.bf16.mxu0 0
  %379 = vmatpush1.bf16.msra.mxu0 %v376
  %380 = vmatprep.subr.bf16.mxu0 0
  %381 = vmatpush1.bf16.msra.mxu0 0
  %382 = vmatprep.subr.bf16.mxu0 0
  %383 = vmatpush1.bf16.msra.mxu0 0
  %384 = vmatprep.subr.bf16.mxu0 0
  %385 = vmatpush1.bf16.msra.mxu0 0
  %386 = vmatprep.subr.bf16.mxu0 0
  %387 = vmatpush1.bf16.msra.mxu0 0
  %388 = vmatprep.subr.bf16.mxu0 0
  %389 = vmatpush1.bf16.msra.mxu0 0
  %390 = vmatprep.subr.bf16.mxu0 0
  %391 = vmatpush1.bf16.msra.mxu0 0
  %392 = vmatprep.subr.bf16.mxu0 0
  %393 = vmatpush1.bf16.msra.mxu0 0
  %394 = vmatprep.subr.bf16.mxu0 0
  %395 = vmatpush1.bf16.msra.mxu0 0
  %396 = vmatprep.subr.bf16.mxu0 0
  %397 = vmatpush1.bf16.msra.mxu0 0
  %398 = vmatprep.subr.bf16.mxu0 0
  %399 = vmatpush1.bf16.msra.mxu0 0
  %400 = vmatprep.subr.bf16.mxu0 0
  %401 = vmatpush1.bf16.msra.mxu0 0
  %402 = vmatprep.subr.bf16.mxu0 0
  %403 = vmatpush1.bf16.msra.mxu0 0
  %404 = vmatprep.subr.bf16.mxu0 0
  %405 = vmatpush1.bf16.msra.mxu0 0
  %406 = vmatprep.subr.bf16.mxu0 0
  %407 = vmatpush1.bf16.msra.mxu0 0
  %408 = vmatprep.subr.bf16.mxu0 0
  %409 = vmatpush1.bf16.msra.mxu0 0
  %410 = vmatprep.mubr.bf16.mxu0 0
  %411 = vmatmul.mubr.bf16.gmra.mrb[0].mxu0 %v67
  %v412 = vpop.f32.mrb[0].mxu0
  %v413 = vadd.f32 0.0, %v412
  %v414 = vpop.f32.mrb[0].mxu0
  %v415 = vpop.f32.mrb[0].mxu0
  %v416 = vpop.f32.mrb[0].mxu0
  %417 = vdwg.mxu0
  %419 = vrot.lane.b32.xlu0 %v372, 120
  %v420 = vpop.permute.xlu0 %419
  %v422 = vsel %vm65, %v420, 0
  %v425 = vsel %vm69, %v373, 0
  %427 = vmatprep.subr.bf16.mxu0 0
  %428 = vmatpush1.bf16.msra.mxu0 %v425
  %429 = vmatprep.subr.bf16.mxu0 0
  %430 = vmatpush1.bf16.msra.mxu0 0
  %431 = vmatprep.subr.bf16.mxu0 0
  %432 = vmatpush1.bf16.msra.mxu0 0
  %433 = vmatprep.subr.bf16.mxu0 0
  %434 = vmatpush1.bf16.msra.mxu0 0
  %435 = vmatprep.subr.bf16.mxu0 0
  %436 = vmatpush1.bf16.msra.mxu0 0
  %437 = vmatprep.subr.bf16.mxu0 0
  %438 = vmatpush1.bf16.msra.mxu0 0
  %439 = vmatprep.subr.bf16.mxu0 0
  %440 = vmatpush1.bf16.msra.mxu0 0
  %441 = vmatprep.subr.bf16.mxu0 0
  %442 = vmatpush1.bf16.msra.mxu0 0
  %443 = vmatprep.subr.bf16.mxu0 0
  %444 = vmatpush1.bf16.msra.mxu0 0
  %445 = vmatprep.subr.bf16.mxu0 0
  %446 = vmatpush1.bf16.msra.mxu0 0
  %447 = vmatprep.subr.bf16.mxu0 0
  %448 = vmatpush1.bf16.msra.mxu0 0
  %449 = vmatprep.subr.bf16.mxu0 0
  %450 = vmatpush1.bf16.msra.mxu0 0
  %451 = vmatprep.subr.bf16.mxu0 0
  %452 = vmatpush1.bf16.msra.mxu0 0
  %453 = vmatprep.subr.bf16.mxu0 0
  %454 = vmatpush1.bf16.msra.mxu0 0
  %455 = vmatprep.subr.bf16.mxu0 0
  %456 = vmatpush1.bf16.msra.mxu0 0
  %457 = vmatprep.subr.bf16.mxu0 0
  %458 = vmatpush1.bf16.msra.mxu0 0
  %459 = vmatprep.mubr.bf16.mxu0 0
  %460 = vmatmul.mubr.bf16.gmra.mrb[0].mxu0 %v422
  %v461 = vpop.f32.mrb[0].mxu0
  %v462 = vadd.f32 %v413, %v461
  %v463 = vpop.f32.mrb[0].mxu0
  %v464 = vpop.f32.mrb[0].mxu0
  %v465 = vpop.f32.mrb[0].mxu0
  %466 = vdwg.mxu0
  %v467 = vld [vmem:[%s14] sm:$0x1]
  %v469 = vlaneseq
  %v470 = vshrl.u32 %v469, 7
  %v471 = vsub.s32 0, %v470
  %v472 = vrot.slane %v467, %v471
  %v474 = vadd.f32 %v462, %v472
  %v475 = vmax.f32 %v474, 0.0
  %v476 = vpack.c.bf16 %v475, %v475
  %v477 = vld [vmem:[%s15] sm:$0xf]
  %v478 = vld [vmem:[%s15 + $0x4] sm:$0xf]
  %v479 = vld [vmem:[%s15 + $0x8] sm:$0xf]
  %v480 = vld [vmem:[%s15 + $0xc] sm:$0xf]
  %v481 = vld [vmem:[%s16] sm:$0x1]
  %v483 = vlaneseq
  %v484 = vshrl.u32 %v483, 7
  %v485 = vsub.s32 0, %v484
  %v486 = vrot.slane %v481, %v485
  %v492 = vunpack.c.l.b16 %v477
  %v493 = vunpack.c.l.b16 %v478
  %v494 = vunpack.c.l.b16 %v479
  %v495 = vunpack.c.l.b16 %v480
  %v496 = vpack.c.b16 %v493, %v492
  %v497 = vpack.c.b16 %v495, %v494
  %v501 = vsel %vm196, %v476, 0
  %503 = vmatprep.subr.bf16.mxu0 0
  %504 = vmatpush1.bf16.msra.mxu0 %v496
  %505 = vmatprep.subr.bf16.mxu0 0
  %506 = vmatpush1.bf16.msra.mxu0 %v497
  %507 = vmatprep.subr.bf16.mxu0 0
  %508 = vmatpush1.bf16.msra.mxu0 0
  %509 = vmatprep.subr.bf16.mxu0 0
  %510 = vmatpush1.bf16.msra.mxu0 0
  %511 = vmatprep.subr.bf16.mxu0 0
  %512 = vmatpush1.bf16.msra.mxu0 0
  %513 = vmatprep.subr.bf16.mxu0 0
  %514 = vmatpush1.bf16.msra.mxu0 0
  %515 = vmatprep.subr.bf16.mxu0 0
  %516 = vmatpush1.bf16.msra.mxu0 0
  %517 = vmatprep.subr.bf16.mxu0 0
  %518 = vmatpush1.bf16.msra.mxu0 0
  %519 = vmatprep.subr.bf16.mxu0 0
  %520 = vmatpush1.bf16.msra.mxu0 0
  %521 = vmatprep.subr.bf16.mxu0 0
  %522 = vmatpush1.bf16.msra.mxu0 0
  %523 = vmatprep.subr.bf16.mxu0 0
  %524 = vmatpush1.bf16.msra.mxu0 0
  %525 = vmatprep.subr.bf16.mxu0 0
  %526 = vmatpush1.bf16.msra.mxu0 0
  %527 = vmatprep.subr.bf16.mxu0 0
  %528 = vmatpush1.bf16.msra.mxu0 0
  %529 = vmatprep.subr.bf16.mxu0 0
  %530 = vmatpush1.bf16.msra.mxu0 0
  %531 = vmatprep.subr.bf16.mxu0 0
  %532 = vmatpush1.bf16.msra.mxu0 0
  %533 = vmatprep.subr.bf16.mxu0 0
  %534 = vmatpush1.bf16.msra.mxu0 0
  %535 = vmatprep.mubr.bf16.mxu0 0
  %536 = vmatmul.mubr.bf16.gmra.mrb[0].mxu0 %v501
  %v537 = vpop.f32.mrb[0].mxu0
  %v538 = vadd.f32 %v486, %v537
  %v539 = vpop.f32.mrb[0].mxu0
  %v540 = vpop.f32.mrb[0].mxu0
  %v541 = vpop.f32.mrb[0].mxu0
  %542 = vdwg.mxu0
  %543 = vrot.lane.b32.xlu0 %v235, 16
  %v544 = vpop.permute.xlu0 %543
  %547 = vrot.lane.b32.xlu0 %v171, 32
  %v548 = vpop.permute.xlu0 %547
  %551 = vrot.lane.b32.xlu0 %v354, 64
  %v552 = vpop.permute.xlu0 %551
  %555 = vrot.lane.b32.xlu0 %v475, 80
  %v556 = vpop.permute.xlu0 %555
  %v558 = vsel %vm119, %v538, %v544
  %vm559 = vcmask 195584
  %v560 = vsel %vm559, %v558, %v544
  %v561 = vsel %vm196, %v560, %v548
  %vm562 = vcmask 523264
  %v563 = vsel %vm562, %v561, %v552
  %vm564 = vcmask 588800
  %v565 = vsel %vm564, %v563, %v552
  %vm566 = vcmask 654336
  %v567 = vsel %vm566, %v565, %v556
  %vm568 = vcmask 916480
  %v569 = vsel %vm568, %v567, 0.0
  %570 = vst [vmem:[%s17] sm:$0xff] %v569
  // Predicated region
  $region70: #{cvae_forward.1} parent=0 // pred_check
    _
  $region71: #{cvae_forward.1} parent=0 // pred_check_branch
    %572 = sbr.rel (0) target = $region73
  $region72: #{cvae_forward.1} parent=0 // pred_region
    _
  $region73: #{cvae_forward.1} parent=0 // pred_fallthru
    _
  // Predicated region
  $region74: #{cvae_forward.1} parent=0 // pred_check
    _
  $region75: #{cvae_forward.1} parent=0 // pred_check_branch
    %574 = sbr.rel (0) target = $region77
  $region76: #{cvae_forward.1} parent=0 // pred_region
    _
  $region77: #{cvae_forward.1} parent=0 // pred_fallthru
    _

</llo_original>
